<compile_context>
chip_gen: v6e
topology: v6e:2x2x1
jax: 0.10.0
libtpu: 0.0.40
codegen_flags: <defaults>
</compile_context>

<pallas_src>
import functools

import jax
import jax.numpy as jnp
from jax.experimental import pallas as pl
from jax.experimental.pallas import tpu as pltpu


def _reviews_decoder_kernel(x_ref, w1_ref, b1_ref, w2_ref, b2_ref, o_ref):
    # x_ref: (tb, target_dim), w1: (target_dim, hidden), b1: (1, hidden)
    # w2: (hidden, emb_dim), b2: (1, emb_dim), o_ref: (tb, emb_dim)
    x = x_ref[...]

    # Linear 1 + ReLU (accumulate in f32 on the MXU)
    h = jnp.dot(x, w1_ref[...], preferred_element_type=jnp.float32)
    h = h + b1_ref[...].astype(jnp.float32)
    h = jnp.maximum(h, 0.0)

    # Linear 2
    y = jnp.dot(h.astype(w2_ref.dtype), w2_ref[...],
                preferred_element_type=jnp.float32)
    y = y + b2_ref[...].astype(jnp.float32)

    o_ref[...] = y.astype(o_ref.dtype)


@functools.partial(jax.jit, static_argnames=("block_b",))
def reviews_decoder(x, w1, b1, w2, b2, *, block_b=512):
    """x: (B, target_dim); w1: (target_dim, hidden); b1: (1, hidden);
    w2: (hidden, emb_dim); b2: (1, emb_dim). Returns (B, emb_dim)."""
    B, target_dim = x.shape
    hidden_dim = w1.shape[1]
    emb_dim = w2.shape[1]

    # Clamp the batch tile to the problem size and round to a sublane multiple (8).
    bb = min(block_b, max(B, 8))
    bb = ((bb + 7) // 8) * 8

    grid_b = pl.cdiv(B, bb)
    B_pad = grid_b * bb
    if B_pad != B:
        # Wrapper-side padding of the batch; padded rows are sliced off below.
        x = jnp.pad(x, ((0, B_pad - B), (0, 0)))

    out = pl.pallas_call(
        _reviews_decoder_kernel,
        out_shape=jax.ShapeDtypeStruct((B_pad, emb_dim), x.dtype),
        grid_spec=pltpu.PrefetchScalarGridSpec(
            num_scalar_prefetch=0,
            grid=(grid_b,),
            in_specs=[
                pl.BlockSpec((bb, target_dim), lambda i: (i, 0)),
                pl.BlockSpec((target_dim, hidden_dim), lambda i: (0, 0)),
                pl.BlockSpec((1, hidden_dim), lambda i: (0, 0)),
                pl.BlockSpec((hidden_dim, emb_dim), lambda i: (0, 0)),
                pl.BlockSpec((1, emb_dim), lambda i: (0, 0)),
            ],
            out_specs=pl.BlockSpec((bb, emb_dim), lambda i: (i, 0)),
        ),
        compiler_params=pltpu.CompilerParams(
            dimension_semantics=("parallel",),
        ),
    )(x, w1, b1, w2, b2)

    return out[:B]


def reference_forward(x, w1, b1, w2, b2):
    h = jnp.maximum(x @ w1 + b1, 0.0)
    return h @ w2 + b2


if __name__ == "__main__":
    # Module defaults: target_dim=100, hidden_dim=200, emb_dim=768.
    target_dim, hidden_dim, emb_dim = 100, 200, 768
    # B > block_b and B not divisible by the tile -> exercises multi-step grid,
    # index_map correctness, and the cdiv/padding tail path.
    batch = 36
    block_b = 16

    key = jax.random.PRNGKey(0)
    kx, kw1, kb1, kw2, kb2 = jax.random.split(key, 5)

    x = jax.random.normal(kx, (batch, target_dim), dtype=jnp.float32)
    # Deterministic "nn.Linear"-style params, stored as (in, out) for x @ W.
    w1 = jax.random.normal(kw1, (target_dim, hidden_dim), dtype=jnp.float32) * 0.1
    b1 = jax.random.normal(kb1, (1, hidden_dim), dtype=jnp.float32) * 0.01
    w2 = jax.random.normal(kw2, (hidden_dim, emb_dim), dtype=jnp.float32) * 0.1
    b2 = jax.random.normal(kb2, (1, emb_dim), dtype=jnp.float32) * 0.01

    out = reviews_decoder(x, w1, b1, w2, b2, block_b=block_b)
    out = jax.block_until_ready(out)

    ref = reference_forward(x, w1, b1, w2, b2)
    assert out.shape == (batch, emb_dim), out.shape
    assert jnp.allclose(out, ref, atol=1e-3, rtol=1e-3), "mismatch vs reference"

    print("KERNEL_OK")
</pallas_src>

<mosaic_0001>
module attributes {stable_mosaic.version = 11 : i64} {
  func.func @_reviews_decoder_kernel(%arg0: i32, %arg1: memref<16x100xf32, #tpu.memory_space<vmem>>, %arg2: memref<100x200xf32, #tpu.memory_space<vmem>>, %arg3: memref<1x200xf32, #tpu.memory_space<vmem>>, %arg4: memref<200x768xf32, #tpu.memory_space<vmem>>, %arg5: memref<1x768xf32, #tpu.memory_space<vmem>>, %arg6: memref<16x768xf32, #tpu.memory_space<vmem>>) attributes {dimension_semantics = [#tpu.dimension_semantics<parallel>], iteration_bounds = array<i64: 3>, scalar_prefetch = 0 : i64, scratch_operands = 0 : i64, tpu.core_type = #tpu.core_type<tc>, window_params = [{transform_indices = @transform_0, window_bounds = array<i64: 16, 100>}, {pipeline_mode = #tpu.pipeline_mode<synchronous>, transform_indices = @transform_1, window_bounds = array<i64: 100, 200>}, {pipeline_mode = #tpu.pipeline_mode<synchronous>, transform_indices = @transform_2, window_bounds = array<i64: 1, 200>}, {pipeline_mode = #tpu.pipeline_mode<synchronous>, transform_indices = @transform_3, window_bounds = array<i64: 200, 768>}, {pipeline_mode = #tpu.pipeline_mode<synchronous>, transform_indices = @transform_4, window_bounds = array<i64: 1, 768>}, {transform_indices = @transform_5, window_bounds = array<i64: 16, 768>}]} {
    %c0 = arith.constant 0 : index
    %c0_0 = arith.constant 0 : index
    %0 = vector.load %arg1[%c0, %c0_0] : memref<16x100xf32, #tpu.memory_space<vmem>>, vector<16x100xf32>
    %c0_1 = arith.constant 0 : index
    %c0_2 = arith.constant 0 : index
    %1 = vector.load %arg2[%c0_1, %c0_2] : memref<100x200xf32, #tpu.memory_space<vmem>>, vector<100x200xf32>
    %cst = arith.constant dense<0.000000e+00> : vector<16x200xf32>
    %2 = tpu.matmul %0, %1, %cst {dimension_numbers = #tpu.dot_dimension_numbers<[1], [0], [0], [1], [0, 0, 1, 1], [], []>} : vector<16x100xf32>, vector<100x200xf32>, vector<16x200xf32> -> vector<16x200xf32>
    %c0_3 = arith.constant 0 : index
    %c0_4 = arith.constant 0 : index
    %3 = vector.load %arg3[%c0_3, %c0_4] : memref<1x200xf32, #tpu.memory_space<vmem>>, vector<1x200xf32>
    %4 = vector.broadcast %3 : vector<1x200xf32> to vector<16x200xf32>
    %5 = arith.addf %2, %4 : vector<16x200xf32>
    %cst_5 = arith.constant 0.000000e+00 : f32
    %6 = vector.broadcast %cst_5 : f32 to vector<16x200xf32>
    %7 = arith.maximumf %5, %6 : vector<16x200xf32>
    %c0_6 = arith.constant 0 : index
    %c0_7 = arith.constant 0 : index
    %8 = vector.load %arg4[%c0_6, %c0_7] : memref<200x768xf32, #tpu.memory_space<vmem>>, vector<200x768xf32>
    %cst_8 = arith.constant dense<0.000000e+00> : vector<16x768xf32>
    %9 = tpu.matmul %7, %8, %cst_8 {dimension_numbers = #tpu.dot_dimension_numbers<[1], [0], [0], [1], [0, 0, 1, 1], [], []>} : vector<16x200xf32>, vector<200x768xf32>, vector<16x768xf32> -> vector<16x768xf32>
    %c0_9 = arith.constant 0 : index
    %c0_10 = arith.constant 0 : index
    %10 = vector.load %arg5[%c0_9, %c0_10] : memref<1x768xf32, #tpu.memory_space<vmem>>, vector<1x768xf32>
    %11 = vector.broadcast %10 : vector<1x768xf32> to vector<16x768xf32>
    %12 = arith.addf %9, %11 : vector<16x768xf32>
    %c0_11 = arith.constant 0 : index
    %c0_12 = arith.constant 0 : index
    %13 = vector.load %arg6[%c0_11, %c0_12] : memref<16x768xf32, #tpu.memory_space<vmem>>, vector<16x768xf32>
    tpu.vector_store %arg6[%c0_11, %c0_12], %12 {strides = array<i32>} : memref<16x768xf32, #tpu.memory_space<vmem>>, vector<16x768xf32>,
    return
  }
  func.func @transform_0(%arg0: i32) -> (i32, i32) {
    %c0_i32 = arith.constant 0 : i32
    %c0_i32_0 = arith.constant 0 : i32
    return %arg0, %c0_i32 : i32, i32
  }
  func.func @transform_1(%arg0: i32) -> (i32, i32) {
    %c0_i32 = arith.constant 0 : i32
    %c0_i32_0 = arith.constant 0 : i32
    %c0_i32_1 = arith.constant 0 : i32
    return %c0_i32, %c0_i32_0 : i32, i32
  }
  func.func @transform_2(%arg0: i32) -> (i32, i32) {
    %c0_i32 = arith.constant 0 : i32
    %c0_i32_0 = arith.constant 0 : i32
    %c0_i32_1 = arith.constant 0 : i32
    return %c0_i32, %c0_i32_0 : i32, i32
  }
  func.func @transform_3(%arg0: i32) -> (i32, i32) {
    %c0_i32 = arith.constant 0 : i32
    %c0_i32_0 = arith.constant 0 : i32
    %c0_i32_1 = arith.constant 0 : i32
    return %c0_i32, %c0_i32_0 : i32, i32
  }
  func.func @transform_4(%arg0: i32) -> (i32, i32) {
    %c0_i32 = arith.constant 0 : i32
    %c0_i32_0 = arith.constant 0 : i32
    %c0_i32_1 = arith.constant 0 : i32
    return %c0_i32, %c0_i32_0 : i32, i32
  }
  func.func @transform_5(%arg0: i32) -> (i32, i32) {
    %c0_i32 = arith.constant 0 : i32
    %c0_i32_0 = arith.constant 0 : i32
    return %arg0, %c0_i32 : i32, i32
  }
}

</mosaic_0001>

<llo_original>
// kernel: reviews_decoder.1
$region0: #{reviews_decoder.1}
  #allocation0 [shape = 'u32[]', space=smem, size = 0x4, offset = 0x4, fixed_abs, tag = 'smem constant byte address 0x4 - core index']
  #allocation1 [shape = 'u32[144,128]{1,0:T(1,128)}', space=vmem, size = 0x12000, scoped, tag = 'internal scratch']
  %s0 = inlined_call_operand.vmem [shape: f32[48,100], index: 0, kind: input, shape index: {}]
  %s1 = inlined_call_operand.vmem [shape: f32[100,200], index: 1, kind: input, shape index: {}]
  %s2 = inlined_call_operand.vmem [shape: f32[1,200], index: 2, kind: input, shape index: {}]
  %s3 = inlined_call_operand.hbm [shape: f32[200,768], index: 3, kind: input, shape index: {}]
  %s4 = inlined_call_operand.vmem [shape: f32[1,768], index: 4, kind: input, shape index: {}]
  %s5 = inlined_call_operand.vmem [shape: f32[48,768], index: 5, kind: output, shape index: {}]
  %s6 = sld [smem:[#allocation0]]
  $region57: #{reviews_decoder.1} parent=0
    _
  %s8 = ssub.s32 1, %s6
  %s9 = scalar_select 0, %s8, %s6
  $region1: #{reviews_decoder.1} parent=0
    #allocation2 [shape = 'u8[614400]{0}', space=vmem, size = 0x96000, scoped, tag = 'input window, operand 3, single buffered']
    #allocation3 [shape = 's32[2]{0}', space=sflag, size = 0x8, scoped, tag = 'scoped memory for reviews_decoder.1']
    %10 = vsyncpa [#allocation3], 0
    loop: start=0, step=1, limit=5
    $region2: #{reviews_decoder.1} parent=1 // loop_pre_header
      _
    $region3: #{reviews_decoder.1} parent=1 // loop_header
      %s12 = sphi 0, %s16
      %p13 = scmp.ge.s32.totalorder %s12, 5
      %s22 = sphi 0, %s24
      %s25 = sphi 0, %s22
      %s26 = sphi 0, %s25
      %s42 = sphi 0, %s26
      %s46 = sphi 0, %s46
      %s48 = sphi 0, %s46
      %s49 = sphi 0, %s48
      %s63 = sphi 0, %s49
      %s67 = sphi 0, %s67
      %s69 = sphi 0, %s67
      %s70 = sphi 0, %s69
      %s84 = sphi 0, %s70
      %s88 = sphi 0, %s88
      %s90 = sphi 0, %s88
      %s91 = sphi 0, %s90
      %s105 = sphi 0, %s91
      %s109 = sphi 0, %s109
      %s111 = sphi 0, %s109
      %s112 = sphi 0, %s111
      %s126 = sphi 0, %s112
      %s132 = sphi 0, %s134
      %s135 = sphi 0, %s132
      %s136 = sphi 0, %s135
      %s152 = sphi 0, %s136
    $region4: #{reviews_decoder.1} parent=1 // loop_header_branch
      %15 = sbr.rel (%p13) target = $region8
    $region5: #{reviews_decoder.1} parent=1 // loop_body
      %s17 = ssub.s32 %s12, 1
      %s18 = ssub.s32 %s12, 2
      %s19 = sadd.s32 %s12, 1
      %s20 = ssub.s32 %s12, %s19
      %p21 = scmp.eq.s32.totalorder %s20, 0
      %s23 = sadd.s32 %s22, 1
      %s24 = scalar_select %p21, %s22, %s23
      %p27 = pneg %p21
      %p28 = scmp.eq.s32.totalorder %s12, 2
      %p29 = por %p27, %p28
      %p30 = scmp.ne.s32.totalorder %s22, %s25
      %p31 = scmp.eq.s32.totalorder %s12, 0
      %p32 = por %p30, %p31
      %p33 = scmp.ne.s32.totalorder %s22, %s25
      %p34 = scmp.eq.s32.totalorder %s17, 2
      %p35 = por %p33, %p34
      %p36 = scmp.ne.s32.totalorder %s25, %s26
      %p37 = scmp.eq.s32.totalorder %s17, 0
      %p38 = por %p36, %p37
      %p39 = scmp.ne.s32.totalorder %s25, %s26
      %p40 = scmp.eq.s32.totalorder %s18, 2
      %p41 = por %p39, %p40
      %p43 = scmp.ne.s32.totalorder %s26, %s42
      %p44 = scmp.eq.s32.totalorder %s18, 0
      %p45 = por %p43, %p44
      %s47 = sadd.s32 %s46, 1
      %p50 = scmp.eq.s32.totalorder %s12, 2
      %p51 = scmp.ne.s32.totalorder %s46, %s48
      %p52 = scmp.eq.s32.totalorder %s12, 0
      %p53 = por %p51, %p52
      %p54 = scmp.ne.s32.totalorder %s46, %s48
      %p55 = scmp.eq.s32.totalorder %s17, 2
      %p56 = por %p54, %p55
      %p57 = scmp.ne.s32.totalorder %s48, %s49
      %p58 = scmp.eq.s32.totalorder %s17, 0
      %p59 = por %p57, %p58
      %p60 = scmp.ne.s32.totalorder %s48, %s49
      %p61 = scmp.eq.s32.totalorder %s18, 2
      %p62 = por %p60, %p61
      %p64 = scmp.ne.s32.totalorder %s49, %s63
      %p65 = scmp.eq.s32.totalorder %s18, 0
      %p66 = por %p64, %p65
      %s68 = sadd.s32 %s67, 1
      %p71 = scmp.eq.s32.totalorder %s12, 2
      %p72 = scmp.ne.s32.totalorder %s67, %s69
      %p73 = scmp.eq.s32.totalorder %s12, 0
      %p74 = por %p72, %p73
      %p75 = scmp.ne.s32.totalorder %s67, %s69
      %p76 = scmp.eq.s32.totalorder %s17, 2
      %p77 = por %p75, %p76
      %p78 = scmp.ne.s32.totalorder %s69, %s70
      %p79 = scmp.eq.s32.totalorder %s17, 0
      %p80 = por %p78, %p79
      %p81 = scmp.ne.s32.totalorder %s69, %s70
      %p82 = scmp.eq.s32.totalorder %s18, 2
      %p83 = por %p81, %p82
      %p85 = scmp.ne.s32.totalorder %s70, %s84
      %p86 = scmp.eq.s32.totalorder %s18, 0
      %p87 = por %p85, %p86
      %s89 = sadd.s32 %s88, 1
      %p92 = scmp.eq.s32.totalorder %s12, 2
      %p93 = scmp.ne.s32.totalorder %s88, %s90
      %p94 = scmp.eq.s32.totalorder %s12, 0
      %p95 = por %p93, %p94
      %p96 = scmp.ne.s32.totalorder %s88, %s90
      %p97 = scmp.eq.s32.totalorder %s17, 2
      %p98 = por %p96, %p97
      %p99 = scmp.ne.s32.totalorder %s90, %s91
      %p100 = scmp.eq.s32.totalorder %s17, 0
      %p101 = por %p99, %p100
      %p102 = scmp.ne.s32.totalorder %s90, %s91
      %p103 = scmp.eq.s32.totalorder %s18, 2
      %p104 = por %p102, %p103
      %p106 = scmp.ne.s32.totalorder %s91, %s105
      %p107 = scmp.eq.s32.totalorder %s18, 0
      %p108 = por %p106, %p107
      %s110 = sadd.s32 %s109, 1
      %p113 = scmp.eq.s32.totalorder %s12, 2
      %p114 = scmp.ne.s32.totalorder %s109, %s111
      %p115 = scmp.eq.s32.totalorder %s12, 0
      %p116 = por %p114, %p115
      %p117 = scmp.ne.s32.totalorder %s109, %s111
      %p118 = scmp.eq.s32.totalorder %s17, 2
      %p119 = por %p117, %p118
      %p120 = scmp.ne.s32.totalorder %s111, %s112
      %p121 = scmp.eq.s32.totalorder %s17, 0
      %p122 = por %p120, %p121
      %p123 = scmp.ne.s32.totalorder %s111, %s112
      %p124 = scmp.eq.s32.totalorder %s18, 2
      %p125 = por %p123, %p124
      %p127 = scmp.ne.s32.totalorder %s112, %s126
      %p128 = scmp.eq.s32.totalorder %s18, 0
      %p129 = por %p127, %p128
      %s130 = ssub.s32 %s12, %s19
      %p131 = scmp.eq.s32.totalorder %s130, 0
      %s133 = sadd.s32 %s132, 1
      %s134 = scalar_select %p131, %s132, %s133
      %p137 = pneg %p131
      %p138 = scmp.eq.s32.totalorder %s12, 2
      %p139 = por %p137, %p138
      %p140 = scmp.ne.s32.totalorder %s132, %s135
      %p141 = scmp.eq.s32.totalorder %s12, 0
      %p142 = por %p140, %p141
      %p143 = scmp.ne.s32.totalorder %s132, %s135
      %p144 = scmp.eq.s32.totalorder %s17, 2
      %p145 = por %p143, %p144
      %p146 = scmp.ne.s32.totalorder %s135, %s136
      %p147 = scmp.eq.s32.totalorder %s17, 0
      %p148 = por %p146, %p147
      %p149 = scmp.ne.s32.totalorder %s135, %s136
      %p150 = scmp.eq.s32.totalorder %s18, 2
      %p151 = por %p149, %p150
      %p153 = scmp.ne.s32.totalorder %s136, %s152
      %p154 = scmp.eq.s32.totalorder %s18, 0
      %p155 = por %p153, %p154
      %p156 = scmp.le.s32.totalorder 1, %s12
      %p157 = scmp.lt.s32.totalorder %s12, 4
      %p158 = pnand %p156, %p157
      %p159 = pneg %p158
      // Predicated region
      $region9: #{reviews_decoder.1} parent=5 // pred_check
        _
      $region10: #{reviews_decoder.1} parent=5 // pred_check_branch
        %161 = sbr.rel (%p158) target = $region12
      $region11: #{reviews_decoder.1} parent=5 // pred_region
        %s162 = ssub.s32 %s12, 1
        // Predicated region
        $region13: #{reviews_decoder.1} parent=11 // pred_check
          %p163 = pneg %p59
        $region14: #{reviews_decoder.1} parent=11 // pred_check_branch
          %165 = sbr.rel (%p163) target = $region16
        $region15: #{reviews_decoder.1} parent=11 // pred_region
          _
        $region16: #{reviews_decoder.1} parent=11 // pred_fallthru
          _
        // Predicated region
        $region17: #{reviews_decoder.1} parent=11 // pred_check
          %p166 = pneg %p80
        $region18: #{reviews_decoder.1} parent=11 // pred_check_branch
          %168 = sbr.rel (%p166) target = $region20
        $region19: #{reviews_decoder.1} parent=11 // pred_region
          _
        $region20: #{reviews_decoder.1} parent=11 // pred_fallthru
          _
        // Predicated region
        $region21: #{reviews_decoder.1} parent=11 // pred_check
          %p169 = pneg %p101
        $region22: #{reviews_decoder.1} parent=11 // pred_check_branch
          %171 = sbr.rel (%p169) target = $region24
        $region23: #{reviews_decoder.1} parent=11 // pred_region
          %s173 = ssub.s32 19200, 19200
          %174 = vsyncadd [#allocation3], %s173
          %s175 = sshll.u32 [#allocation2], 4
          %s176 = int_to_ptr.vmem [resolvable:$true] %s175
          %181 = dma.hbm_to_vmem [thread:$0]  %s3, 19200, %s176, [#allocation3], 768, 768, 48
        $region24: #{reviews_decoder.1} parent=11 // pred_fallthru
          _
        // Predicated region
        $region25: #{reviews_decoder.1} parent=11 // pred_check
          %p182 = pneg %p122
        $region26: #{reviews_decoder.1} parent=11 // pred_check_branch
          %184 = sbr.rel (%p182) target = $region28
        $region27: #{reviews_decoder.1} parent=11 // pred_region
          _
        $region28: #{reviews_decoder.1} parent=11 // pred_fallthru
          _
      $region12: #{reviews_decoder.1} parent=5 // pred_fallthru
        _
      %p185 = scmp.lt.s32.totalorder %s12, 3
      // Predicated region
      $region29: #{reviews_decoder.1} parent=5 // pred_check
        %p186 = pneg %p185
      $region30: #{reviews_decoder.1} parent=5 // pred_check_branch
        %188 = sbr.rel (%p186) target = $region32
      $region31: #{reviews_decoder.1} parent=5 // pred_region
        // Predicated region
        $region33: #{reviews_decoder.1} parent=31 // pred_check
          %p189 = pneg %p32
        $region34: #{reviews_decoder.1} parent=31 // pred_check_branch
          %191 = sbr.rel (%p189) target = $region36
        $region35: #{reviews_decoder.1} parent=31 // pred_region
          %s192 = smul.u32 2, %s12
          %p193 = scmp.lt.s32.totalorder %s192, 5
          %s194 = scalar_select %p193, %s192, 5
          %s195 = smul.addr %s194, 8
          %s196 = scalar_lea.vmem %s0, %s195
          %s197 = smul.u32 2, %s12
        $region36: #{reviews_decoder.1} parent=31 // pred_fallthru
          _
      $region32: #{reviews_decoder.1} parent=5 // pred_fallthru
        _
      %p198 = scmp.le.s32.totalorder 1, %s12
      %p199 = scmp.lt.s32.totalorder %s12, 4
      %p200 = pnand %p198, %p199
      %p201 = pneg %p200
      // Predicated region
      $region37: #{reviews_decoder.1} parent=5 // pred_check
        _
      $region38: #{reviews_decoder.1} parent=5 // pred_check_branch
        %203 = sbr.rel (%p200) target = $region40
      $region39: #{reviews_decoder.1} parent=5 // pred_region
        %s204 = ssub.s32 %s12, 1
        // Predicated region
        $region41: #{reviews_decoder.1} parent=39 // pred_check
          %p205 = pneg %p101
        $region42: #{reviews_decoder.1} parent=39 // pred_check_branch
          %207 = sbr.rel (%p205) target = $region44
        $region43: #{reviews_decoder.1} parent=39 // pred_region
          %208 = dma.done [#allocation3], 19200
        $region44: #{reviews_decoder.1} parent=39 // pred_fallthru
          _
        %s209 = smul.u32 2, %s17
        %p210 = scmp.lt.s32.totalorder %s209, 5
        %s211 = scalar_select %p210, %s209, 5
        %s212 = smul.addr %s211, 8
        %s213 = scalar_lea.vmem %s0, %s212
        %p214 = pneg %p38
        %p215 = pneg %p35
        %p216 = pneg %p59
        %p217 = pneg %p56
        %p218 = pneg %p80
        %p219 = pneg %p77
        %p220 = pneg %p101
        %p221 = pneg %p98
        %p222 = pneg %p122
        %p223 = pneg %p119
        %p224 = pneg %p148
        %p225 = pneg %p145
        %s226 = smul.u32 2, %s17
        %p227 = scmp.lt.s32.totalorder %s226, 5
        %s228 = scalar_select %p227, %s226, 5
        %s229 = smul.addr %s228, 6
        %s230 = smul.addr %s229, 8
        %s231 = scalar_lea.vmem %s5, %s230
        %s232 = smul.u32 2, %s17
        %p233 = scmp.lt.s32.totalorder %s232, 5
        %s234 = scalar_select %p233, %s232, 5
        %s235 = smul.addr %s234, 8
        %s236 = scalar_lea.vmem %s0, %s235
        %s237 = smul.u32 2, %s17
        %s238 = smul.u32 2, %s17
        %p239 = scmp.lt.s32.totalorder %s238, 5
        %s240 = scalar_select %p239, %s238, 5
        %s241 = smul.addr %s240, 6
        %s242 = smul.addr %s241, 8
        %s243 = scalar_lea.vmem %s5, %s242
        %s244 = smul.u32 2, %s17
        %v245 = vld [vmem:[%s236] sm:$0xff]
        %v246 = vld [vmem:[%s236 + $0x8] sm:$0xff]
        %v247 = vld [vmem:[%s1] sm:$0xff]
        %v248 = vld [vmem:[%s1 + $0x8] sm:$0xff]
        %v249 = vld [vmem:[%s1 + $0x10] sm:$0xff]
        %v250 = vld [vmem:[%s1 + $0x18] sm:$0xff]
        %v251 = vld [vmem:[%s1 + $0x20] sm:$0xff]
        %v252 = vld [vmem:[%s1 + $0x28] sm:$0xff]
        %v253 = vld [vmem:[%s1 + $0x30] sm:$0xff]
        %v254 = vld [vmem:[%s1 + $0x38] sm:$0xff]
        %v255 = vld [vmem:[%s1 + $0x40] sm:$0xff]
        %v256 = vld [vmem:[%s1 + $0x48] sm:$0xff]
        %v257 = vld [vmem:[%s1 + $0x50] sm:$0xff]
        %v258 = vld [vmem:[%s1 + $0x58] sm:$0xff]
        %v259 = vld [vmem:[%s1 + $0x60] sm:$0xff]
        %v260 = vld [vmem:[%s1 + $0x68] sm:$0xff]
        %v261 = vld [vmem:[%s1 + $0x70] sm:$0xff]
        %v262 = vld [vmem:[%s1 + $0x78] sm:$0xff]
        %v263 = vld [vmem:[%s1 + $0x80] sm:$0xff]
        %v264 = vld [vmem:[%s1 + $0x88] sm:$0xff]
        %v265 = vld [vmem:[%s1 + $0x90] sm:$0xff]
        %v266 = vld [vmem:[%s1 + $0x98] sm:$0xff]
        %v267 = vld [vmem:[%s1 + $0xa0] sm:$0xff]
        %v268 = vld [vmem:[%s1 + $0xa8] sm:$0xff]
        %v269 = vld [vmem:[%s1 + $0xb0] sm:$0xff]
        %v270 = vld [vmem:[%s1 + $0xb8] sm:$0xff]
        %v271 = vld [vmem:[%s1 + $0xc0] sm:$0xf]
        %v272 = vld [vmem:[%s1 + $0xc8] sm:$0xf]
        %v273 = vld [vmem:[%s2] sm:$0x3]
        %v275 = vlaneseq
        %v276 = vshrl.u32 %v275, 7
        %v277 = vsub.s32 0, %v276
        %v278 = vrot.slane %v273, %v277
        %v279 = vlaneseq
        %v280 = vshrl.u32 %v279, 7
        %v281 = vsub.s32 1, %v280
        %v282 = vrot.slane %v273, %v281
        %vm285 = vcmask 818176
        %v287 = vsel %vm285, %v245, 0
        %v290 = vsel %vm285, %v246, 0
        %vm292 = vcmask 1043456
        %v294 = vsel %vm292, %v271, 0
        %v297 = vsel %vm292, %v272, 0
        %299 = vmatprep.subr.mxu0 0.0
        %300 = vmatpush1.msra.mxu0 0.0
        %301 = vmatprep.subr.mxu0 0.0
        %302 = vmatpush1.msra.mxu0 0.0
        %303 = vmatprep.subr.mxu0 0.0
        %304 = vmatpush1.msra.mxu0 0.0
        %305 = vmatprep.subr.mxu0 %v297
        %306 = vmatpush1.msra.mxu0 %v294
        %307 = vmatprep.subr.mxu0 %v270
        %308 = vmatpush1.msra.mxu0 %v269
        %309 = vmatprep.subr.mxu0 %v268
        %310 = vmatpush1.msra.mxu0 %v267
        %311 = vmatprep.subr.mxu0 %v266
        %312 = vmatpush1.msra.mxu0 %v265
        %313 = vmatprep.subr.mxu0 %v264
        %314 = vmatpush1.msra.mxu0 %v263
        %315 = vmatprep.subr.mxu0 %v262
        %316 = vmatpush1.msra.mxu0 %v261
        %317 = vmatprep.subr.mxu0 %v260
        %318 = vmatpush1.msra.mxu0 %v259
        %319 = vmatprep.subr.mxu0 %v258
        %320 = vmatpush1.msra.mxu0 %v257
        %321 = vmatprep.subr.mxu0 %v256
        %322 = vmatpush1.msra.mxu0 %v255
        %323 = vmatprep.subr.mxu0 %v254
        %324 = vmatpush1.msra.mxu0 %v253
        %325 = vmatprep.subr.mxu0 %v252
        %326 = vmatpush1.msra.mxu0 %v251
        %327 = vmatprep.subr.mxu0 %v250
        %328 = vmatpush1.msra.mxu0 %v249
        %329 = vmatprep.subr.mxu0 %v248
        %330 = vmatpush1.msra.mxu0 %v247
        %331 = vmatprep.subr.mxu0 0.0
        %332 = vmatpush2.msra.mxu0 0.0
        %333 = vmatprep.subr.mxu0 0.0
        %334 = vmatpush2.msra.mxu0 0.0
        %335 = vmatprep.subr.mxu0 0.0
        %336 = vmatpush2.msra.mxu0 0.0
        %337 = vmatprep.subr.mxu0 0.0
        %338 = vmatpush2.msra.mxu0 0.0
        %339 = vmatprep.subr.mxu0 0.0
        %340 = vmatpush2.msra.mxu0 0.0
        %341 = vmatprep.subr.mxu0 0.0
        %342 = vmatpush2.msra.mxu0 0.0
        %343 = vmatprep.subr.mxu0 0.0
        %344 = vmatpush2.msra.mxu0 0.0
        %345 = vmatprep.subr.mxu0 0.0
        %346 = vmatpush2.msra.mxu0 0.0
        %347 = vmatprep.subr.mxu0 0.0
        %348 = vmatpush2.msra.mxu0 0.0
        %349 = vmatprep.subr.mxu0 0.0
        %350 = vmatpush2.msra.mxu0 0.0
        %351 = vmatprep.subr.mxu0 0.0
        %352 = vmatpush2.msra.mxu0 0.0
        %353 = vmatprep.subr.mxu0 0.0
        %354 = vmatpush2.msra.mxu0 0.0
        %355 = vmatprep.subr.mxu0 0.0
        %356 = vmatpush2.msra.mxu0 0.0
        %357 = vmatprep.subr.mxu0 0.0
        %358 = vmatpush2.msra.mxu0 0.0
        %359 = vmatprep.subr.mxu0 0.0
        %360 = vmatpush2.msra.mxu0 0.0
        %361 = vmatprep.subr.mxu0 0.0
        %362 = vmatpush2.msra.mxu0 0.0
        %363 = vmatprep.mubr.f32.mxu0 0.0
        %364 = vmatmul.mubr.f32.gmra.mxu0 %v287
        %v365 = vpop.f32.mrf.mxu0
        %v366 = vadd.f32 %v278, %v365
        %v367 = vpop.f32.mrf.mxu0
        %v368 = vadd.f32 %v282, %v367
        %369 = vmatprep.mubr.f32.mxu0 0.0
        %370 = vmatmul.mubr.f32.gmra.mxu0 %v290
        %v371 = vpop.f32.mrf.mxu0
        %v372 = vadd.f32 %v278, %v371
        %v373 = vpop.f32.mrf.mxu0
        %v374 = vadd.f32 %v282, %v373
        %375 = vdwg.mxu0
        %v376 = vmax.f32 %v366, 0.0
        %v377 = vmax.f32 %v368, 0.0
        %v378 = vmax.f32 %v372, 0.0
        %v379 = vmax.f32 %v374, 0.0
        %v380 = vld [vmem:[#allocation2] sm:$0xff]
        %v381 = vld [vmem:[#allocation2 + $0x8] sm:$0xff]
        %v382 = vld [vmem:[#allocation2 + $0x10] sm:$0xff]
        %v383 = vld [vmem:[#allocation2 + $0x18] sm:$0xff]
        %v384 = vld [vmem:[#allocation2 + $0x20] sm:$0xff]
        %v385 = vld [vmem:[#allocation2 + $0x28] sm:$0xff]
        %v386 = vld [vmem:[#allocation2 + $0x30] sm:$0xff]
        %v387 = vld [vmem:[#allocation2 + $0x38] sm:$0xff]
        %v388 = vld [vmem:[#allocation2 + $0x40] sm:$0xff]
        %v389 = vld [vmem:[#allocation2 + $0x48] sm:$0xff]
        %v390 = vld [vmem:[#allocation2 + $0x50] sm:$0xff]
        %v391 = vld [vmem:[#allocation2 + $0x58] sm:$0xff]
        %v392 = vld [vmem:[#allocation2 + $0x60] sm:$0xff]
        %v393 = vld [vmem:[#allocation2 + $0x68] sm:$0xff]
        %v394 = vld [vmem:[#allocation2 + $0x70] sm:$0xff]
        %v395 = vld [vmem:[#allocation2 + $0x78] sm:$0xff]
        %v396 = vld [vmem:[#allocation2 + $0x80] sm:$0xff]
        %v397 = vld [vmem:[#allocation2 + $0x88] sm:$0xff]
        %v398 = vld [vmem:[#allocation2 + $0x90] sm:$0xff]
        %v399 = vld [vmem:[#allocation2 + $0x98] sm:$0xff]
        %v400 = vld [vmem:[#allocation2 + $0xa0] sm:$0xff]
        %v401 = vld [vmem:[#allocation2 + $0xa8] sm:$0xff]
        %v402 = vld [vmem:[#allocation2 + $0xb0] sm:$0xff]
        %v403 = vld [vmem:[#allocation2 + $0xb8] sm:$0xff]
        %v404 = vld [vmem:[#allocation2 + $0xc0] sm:$0xff]
        %v405 = vld [vmem:[#allocation2 + $0xc8] sm:$0xff]
        %v406 = vld [vmem:[#allocation2 + $0xd0] sm:$0xff]
        %v407 = vld [vmem:[#allocation2 + $0xd8] sm:$0xff]
        %v408 = vld [vmem:[#allocation2 + $0xe0] sm:$0xff]
        %v409 = vld [vmem:[#allocation2 + $0xe8] sm:$0xff]
        %v410 = vld [vmem:[#allocation2 + $0xf0] sm:$0xff]
        %v411 = vld [vmem:[#allocation2 + $0xf8] sm:$0xff]
        %v412 = vld [vmem:[#allocation2 + $0x100] sm:$0xff]
        %v413 = vld [vmem:[#allocation2 + $0x108] sm:$0xff]
        %v414 = vld [vmem:[#allocation2 + $0x110] sm:$0xff]
        %v415 = vld [vmem:[#allocation2 + $0x118] sm:$0xff]
        %v416 = vld [vmem:[#allocation2 + $0x120] sm:$0xff]
        %v417 = vld [vmem:[#allocation2 + $0x128] sm:$0xff]
        %v418 = vld [vmem:[#allocation2 + $0x130] sm:$0xff]
        %v419 = vld [vmem:[#allocation2 + $0x138] sm:$0xff]
        %v420 = vld [vmem:[#allocation2 + $0x140] sm:$0xff]
        %v421 = vld [vmem:[#allocation2 + $0x148] sm:$0xff]
        %v422 = vld [vmem:[#allocation2 + $0x150] sm:$0xff]
        %v423 = vld [vmem:[#allocation2 + $0x158] sm:$0xff]
        %v424 = vld [vmem:[#allocation2 + $0x160] sm:$0xff]
        %v425 = vld [vmem:[#allocation2 + $0x168] sm:$0xff]
        %v426 = vld [vmem:[#allocation2 + $0x170] sm:$0xff]
        %v427 = vld [vmem:[#allocation2 + $0x178] sm:$0xff]
        %v428 = vld [vmem:[#allocation2 + $0x180] sm:$0xff]
        %v429 = vld [vmem:[#allocation2 + $0x188] sm:$0xff]
        %v430 = vld [vmem:[#allocation2 + $0x190] sm:$0xff]
        %v431 = vld [vmem:[#allocation2 + $0x198] sm:$0xff]
        %v432 = vld [vmem:[#allocation2 + $0x1a0] sm:$0xff]
        %v433 = vld [vmem:[#allocation2 + $0x1a8] sm:$0xff]
        %v434 = vld [vmem:[#allocation2 + $0x1b0] sm:$0xff]
        %v435 = vld [vmem:[#allocation2 + $0x1b8] sm:$0xff]
        %v436 = vld [vmem:[#allocation2 + $0x1c0] sm:$0xff]
        %v437 = vld [vmem:[#allocation2 + $0x1c8] sm:$0xff]
        %v438 = vld [vmem:[#allocation2 + $0x1d0] sm:$0xff]
        %v439 = vld [vmem:[#allocation2 + $0x1d8] sm:$0xff]
        %v440 = vld [vmem:[#allocation2 + $0x1e0] sm:$0xff]
        %v441 = vld [vmem:[#allocation2 + $0x1e8] sm:$0xff]
        %v442 = vld [vmem:[#allocation2 + $0x1f0] sm:$0xff]
        %v443 = vld [vmem:[#allocation2 + $0x1f8] sm:$0xff]
        %v444 = vld [vmem:[#allocation2 + $0x200] sm:$0xff]
        %v445 = vld [vmem:[#allocation2 + $0x208] sm:$0xff]
        %v446 = vld [vmem:[#allocation2 + $0x210] sm:$0xff]
        %v447 = vld [vmem:[#allocation2 + $0x218] sm:$0xff]
        %v448 = vld [vmem:[#allocation2 + $0x220] sm:$0xff]
        %v449 = vld [vmem:[#allocation2 + $0x228] sm:$0xff]
        %v450 = vld [vmem:[#allocation2 + $0x230] sm:$0xff]
        %v451 = vld [vmem:[#allocation2 + $0x238] sm:$0xff]
        %v452 = vld [vmem:[#allocation2 + $0x240] sm:$0xff]
        %v453 = vld [vmem:[#allocation2 + $0x248] sm:$0xff]
        %v454 = vld [vmem:[#allocation2 + $0x250] sm:$0xff]
        %v455 = vld [vmem:[#allocation2 + $0x258] sm:$0xff]
        %v456 = vld [vmem:[#allocation2 + $0x260] sm:$0xff]
        %v457 = vld [vmem:[#allocation2 + $0x268] sm:$0xff]
        %v458 = vld [vmem:[#allocation2 + $0x270] sm:$0xff]
        %v459 = vld [vmem:[#allocation2 + $0x278] sm:$0xff]
        %v460 = vld [vmem:[#allocation2 + $0x280] sm:$0xff]
        %v461 = vld [vmem:[#allocation2 + $0x288] sm:$0xff]
        %v462 = vld [vmem:[#allocation2 + $0x290] sm:$0xff]
        %v463 = vld [vmem:[#allocation2 + $0x298] sm:$0xff]
        %v464 = vld [vmem:[#allocation2 + $0x2a0] sm:$0xff]
        %v465 = vld [vmem:[#allocation2 + $0x2a8] sm:$0xff]
        %v466 = vld [vmem:[#allocation2 + $0x2b0] sm:$0xff]
        %v467 = vld [vmem:[#allocation2 + $0x2b8] sm:$0xff]
        %v468 = vld [vmem:[#allocation2 + $0x2c0] sm:$0xff]
        %v469 = vld [vmem:[#allocation2 + $0x2c8] sm:$0xff]
        %v470 = vld [vmem:[#allocation2 + $0x2d0] sm:$0xff]
        %v471 = vld [vmem:[#allocation2 + $0x2d8] sm:$0xff]
        %v472 = vld [vmem:[#allocation2 + $0x2e0] sm:$0xff]
        %v473 = vld [vmem:[#allocation2 + $0x2e8] sm:$0xff]
        %v474 = vld [vmem:[#allocation2 + $0x2f0] sm:$0xff]
        %v475 = vld [vmem:[#allocation2 + $0x2f8] sm:$0xff]
        %v476 = vld [vmem:[#allocation2 + $0x300] sm:$0xff]
        %v477 = vld [vmem:[#allocation2 + $0x308] sm:$0xff]
        %v478 = vld [vmem:[#allocation2 + $0x310] sm:$0xff]
        %v479 = vld [vmem:[#allocation2 + $0x318] sm:$0xff]
        %v480 = vld [vmem:[#allocation2 + $0x320] sm:$0xff]
        %v481 = vld [vmem:[#allocation2 + $0x328] sm:$0xff]
        %v482 = vld [vmem:[#allocation2 + $0x330] sm:$0xff]
        %v483 = vld [vmem:[#allocation2 + $0x338] sm:$0xff]
        %v484 = vld [vmem:[#allocation2 + $0x340] sm:$0xff]
        %v485 = vld [vmem:[#allocation2 + $0x348] sm:$0xff]
        %v486 = vld [vmem:[#allocation2 + $0x350] sm:$0xff]
        %v487 = vld [vmem:[#allocation2 + $0x358] sm:$0xff]
        %v488 = vld [vmem:[#allocation2 + $0x360] sm:$0xff]
        %v489 = vld [vmem:[#allocation2 + $0x368] sm:$0xff]
        %v490 = vld [vmem:[#allocation2 + $0x370] sm:$0xff]
        %v491 = vld [vmem:[#allocation2 + $0x378] sm:$0xff]
        %v492 = vld [vmem:[#allocation2 + $0x380] sm:$0xff]
        %v493 = vld [vmem:[#allocation2 + $0x388] sm:$0xff]
        %v494 = vld [vmem:[#allocation2 + $0x390] sm:$0xff]
        %v495 = vld [vmem:[#allocation2 + $0x398] sm:$0xff]
        %v496 = vld [vmem:[#allocation2 + $0x3a0] sm:$0xff]
        %v497 = vld [vmem:[#allocation2 + $0x3a8] sm:$0xff]
        %v498 = vld [vmem:[#allocation2 + $0x3b0] sm:$0xff]
        %v499 = vld [vmem:[#allocation2 + $0x3b8] sm:$0xff]
        %v500 = vld [vmem:[#allocation2 + $0x3c0] sm:$0xff]
        %v501 = vld [vmem:[#allocation2 + $0x3c8] sm:$0xff]
        %v502 = vld [vmem:[#allocation2 + $0x3d0] sm:$0xff]
        %v503 = vld [vmem:[#allocation2 + $0x3d8] sm:$0xff]
        %v504 = vld [vmem:[#allocation2 + $0x3e0] sm:$0xff]
        %v505 = vld [vmem:[#allocation2 + $0x3e8] sm:$0xff]
        %v506 = vld [vmem:[#allocation2 + $0x3f0] sm:$0xff]
        %v507 = vld [vmem:[#allocation2 + $0x3f8] sm:$0xff]
        %v508 = vld [vmem:[#allocation2 + $0x400] sm:$0xff]
        %v509 = vld [vmem:[#allocation2 + $0x408] sm:$0xff]
        %v510 = vld [vmem:[#allocation2 + $0x410] sm:$0xff]
        %v511 = vld [vmem:[#allocation2 + $0x418] sm:$0xff]
        %v512 = vld [vmem:[#allocation2 + $0x420] sm:$0xff]
        %v513 = vld [vmem:[#allocation2 + $0x428] sm:$0xff]
        %v514 = vld [vmem:[#allocation2 + $0x430] sm:$0xff]
        %v515 = vld [vmem:[#allocation2 + $0x438] sm:$0xff]
        %v516 = vld [vmem:[#allocation2 + $0x440] sm:$0xff]
        %v517 = vld [vmem:[#allocation2 + $0x448] sm:$0xff]
        %v518 = vld [vmem:[#allocation2 + $0x450] sm:$0xff]
        %v519 = vld [vmem:[#allocation2 + $0x458] sm:$0xff]
        %v520 = vld [vmem:[#allocation2 + $0x460] sm:$0xff]
        %v521 = vld [vmem:[#allocation2 + $0x468] sm:$0xff]
        %v522 = vld [vmem:[#allocation2 + $0x470] sm:$0xff]
        %v523 = vld [vmem:[#allocation2 + $0x478] sm:$0xff]
        %v524 = vld [vmem:[#allocation2 + $0x480] sm:$0xff]
        %v525 = vld [vmem:[#allocation2 + $0x488] sm:$0xff]
        %v526 = vld [vmem:[#allocation2 + $0x490] sm:$0xff]
        %v527 = vld [vmem:[#allocation2 + $0x498] sm:$0xff]
        %v528 = vld [vmem:[#allocation2 + $0x4a0] sm:$0xff]
        %v529 = vld [vmem:[#allocation2 + $0x4a8] sm:$0xff]
        %v530 = vld [vmem:[%s4] sm:$0x3f]
        %v532 = vlaneseq
        %v533 = vshrl.u32 %v532, 7
        %v534 = vsub.s32 0, %v533
        %v535 = vrot.slane %v530, %v534
        %v536 = vlaneseq
        %v537 = vshrl.u32 %v536, 7
        %v538 = vsub.s32 1, %v537
        %v539 = vrot.slane %v530, %v538
        %v540 = vlaneseq
        %v541 = vshrl.u32 %v540, 7
        %v542 = vsub.s32 2, %v541
        %v543 = vrot.slane %v530, %v542
        %v544 = vlaneseq
        %v545 = vshrl.u32 %v544, 7
        %v546 = vsub.s32 3, %v545
        %v547 = vrot.slane %v530, %v546
        %v548 = vlaneseq
        %v549 = vshrl.u32 %v548, 7
        %v550 = vsub.s32 4, %v549
        %v551 = vrot.slane %v530, %v550
        %v552 = vlaneseq
        %v553 = vshrl.u32 %v552, 7
        %v554 = vsub.s32 5, %v553
        %v555 = vrot.slane %v530, %v554
        %vm562 = vcmask 588800
        %v564 = vsel %vm562, %v377, 0
        %v567 = vsel %vm562, %v379, 0
        %569 = vmatprep.subr.mxu0 %v471
        %570 = vmatpush1.msra.mxu0 %v470
        %571 = vmatprep.subr.mxu0 %v465
        %572 = vmatpush1.msra.mxu0 %v464
        %573 = vmatprep.subr.mxu0 %v459
        %574 = vmatpush1.msra.mxu0 %v458
        %575 = vmatprep.subr.mxu0 %v453
        %576 = vmatpush1.msra.mxu0 %v452
        %577 = vmatprep.subr.mxu0 %v447
        %578 = vmatpush1.msra.mxu0 %v446
        %579 = vmatprep.subr.mxu0 %v441
        %580 = vmatpush1.msra.mxu0 %v440
        %581 = vmatprep.subr.mxu0 %v435
        %582 = vmatpush1.msra.mxu0 %v434
        %583 = vmatprep.subr.mxu0 %v429
        %584 = vmatpush1.msra.mxu0 %v428
        %585 = vmatprep.subr.mxu0 %v423
        %586 = vmatpush1.msra.mxu0 %v422
        %587 = vmatprep.subr.mxu0 %v417
        %588 = vmatpush1.msra.mxu0 %v416
        %589 = vmatprep.subr.mxu0 %v411
        %590 = vmatpush1.msra.mxu0 %v410
        %591 = vmatprep.subr.mxu0 %v405
        %592 = vmatpush1.msra.mxu0 %v404
        %593 = vmatprep.subr.mxu0 %v399
        %594 = vmatpush1.msra.mxu0 %v398
        %595 = vmatprep.subr.mxu0 %v393
        %596 = vmatpush1.msra.mxu0 %v392
        %597 = vmatprep.subr.mxu0 %v387
        %598 = vmatpush1.msra.mxu0 %v386
        %599 = vmatprep.subr.mxu0 %v381
        %600 = vmatpush1.msra.mxu0 %v380
        %601 = vmatprep.subr.mxu0 0.0
        %602 = vmatpush2.msra.mxu0 0.0
        %603 = vmatprep.subr.mxu0 0.0
        %604 = vmatpush2.msra.mxu0 0.0
        %605 = vmatprep.subr.mxu0 0.0
        %606 = vmatpush2.msra.mxu0 0.0
        %607 = vmatprep.subr.mxu0 0.0
        %608 = vmatpush2.msra.mxu0 0.0
        %609 = vmatprep.subr.mxu0 0.0
        %610 = vmatpush2.msra.mxu0 0.0
        %611 = vmatprep.subr.mxu0 0.0
        %612 = vmatpush2.msra.mxu0 0.0
        %613 = vmatprep.subr.mxu0 0.0
        %614 = vmatpush2.msra.mxu0 0.0
        %615 = vmatprep.subr.mxu0 %v525
        %616 = vmatpush2.msra.mxu0 %v524
        %617 = vmatprep.subr.mxu0 %v519
        %618 = vmatpush2.msra.mxu0 %v518
        %619 = vmatprep.subr.mxu0 %v513
        %620 = vmatpush2.msra.mxu0 %v512
        %621 = vmatprep.subr.mxu0 %v507
        %622 = vmatpush2.msra.mxu0 %v506
        %623 = vmatprep.subr.mxu0 %v501
        %624 = vmatpush2.msra.mxu0 %v500
        %625 = vmatprep.subr.mxu0 %v495
        %626 = vmatpush2.msra.mxu0 %v494
        %627 = vmatprep.subr.mxu0 %v489
        %628 = vmatpush2.msra.mxu0 %v488
        %629 = vmatprep.subr.mxu0 %v483
        %630 = vmatpush2.msra.mxu0 %v482
        %631 = vmatprep.subr.mxu0 %v477
        %632 = vmatpush2.msra.mxu0 %v476
        %633 = vmatprep.mubr.f32.mxu0 %v564
        %634 = vmatmul.mubr.f32.gmra.mxu0 %v376
        %v635 = vpop.f32.mrf.mxu0
        %v636 = vadd.f32 %v535, %v635
        %v637 = vpop.f32.mrf.mxu0
        %v638 = vadd.f32 %v539, %v637
        %639 = vmatprep.mubr.f32.mxu0 %v567
        %640 = vmatmul.mubr.f32.gmra.mxu0 %v378
        %v641 = vpop.f32.mrf.mxu0
        %v642 = vadd.f32 %v535, %v641
        %v643 = vpop.f32.mrf.mxu0
        %v644 = vadd.f32 %v539, %v643
        %645 = vdwg.mxu0
        %646 = vmatprep.subr.mxu0 %v473
        %647 = vmatpush1.msra.mxu0 %v472
        %648 = vmatprep.subr.mxu0 %v467
        %649 = vmatpush1.msra.mxu0 %v466
        %650 = vmatprep.subr.mxu0 %v461
        %651 = vmatpush1.msra.mxu0 %v460
        %652 = vmatprep.subr.mxu0 %v455
        %653 = vmatpush1.msra.mxu0 %v454
        %654 = vmatprep.subr.mxu0 %v449
        %655 = vmatpush1.msra.mxu0 %v448
        %656 = vmatprep.subr.mxu0 %v443
        %657 = vmatpush1.msra.mxu0 %v442
        %658 = vmatprep.subr.mxu0 %v437
        %659 = vmatpush1.msra.mxu0 %v436
        %660 = vmatprep.subr.mxu0 %v431
        %661 = vmatpush1.msra.mxu0 %v430
        %662 = vmatprep.subr.mxu0 %v425
        %663 = vmatpush1.msra.mxu0 %v424
        %664 = vmatprep.subr.mxu0 %v419
        %665 = vmatpush1.msra.mxu0 %v418
        %666 = vmatprep.subr.mxu0 %v413
        %667 = vmatpush1.msra.mxu0 %v412
        %668 = vmatprep.subr.mxu0 %v407
        %669 = vmatpush1.msra.mxu0 %v406
        %670 = vmatprep.subr.mxu0 %v401
        %671 = vmatpush1.msra.mxu0 %v400
        %672 = vmatprep.subr.mxu0 %v395
        %673 = vmatpush1.msra.mxu0 %v394
        %674 = vmatprep.subr.mxu0 %v389
        %675 = vmatpush1.msra.mxu0 %v388
        %676 = vmatprep.subr.mxu0 %v383
        %677 = vmatpush1.msra.mxu0 %v382
        %678 = vmatprep.subr.mxu0 0.0
        %679 = vmatpush2.msra.mxu0 0.0
        %680 = vmatprep.subr.mxu0 0.0
        %681 = vmatpush2.msra.mxu0 0.0
        %682 = vmatprep.subr.mxu0 0.0
        %683 = vmatpush2.msra.mxu0 0.0
        %684 = vmatprep.subr.mxu0 0.0
        %685 = vmatpush2.msra.mxu0 0.0
        %686 = vmatprep.subr.mxu0 0.0
        %687 = vmatpush2.msra.mxu0 0.0
        %688 = vmatprep.subr.mxu0 0.0
        %689 = vmatpush2.msra.mxu0 0.0
        %690 = vmatprep.subr.mxu0 0.0
        %691 = vmatpush2.msra.mxu0 0.0
        %692 = vmatprep.subr.mxu0 %v527
        %693 = vmatpush2.msra.mxu0 %v526
        %694 = vmatprep.subr.mxu0 %v521
        %695 = vmatpush2.msra.mxu0 %v520
        %696 = vmatprep.subr.mxu0 %v515
        %697 = vmatpush2.msra.mxu0 %v514
        %698 = vmatprep.subr.mxu0 %v509
        %699 = vmatpush2.msra.mxu0 %v508
        %700 = vmatprep.subr.mxu0 %v503
        %701 = vmatpush2.msra.mxu0 %v502
        %702 = vmatprep.subr.mxu0 %v497
        %703 = vmatpush2.msra.mxu0 %v496
        %704 = vmatprep.subr.mxu0 %v491
        %705 = vmatpush2.msra.mxu0 %v490
        %706 = vmatprep.subr.mxu0 %v485
        %707 = vmatpush2.msra.mxu0 %v484
        %708 = vmatprep.subr.mxu0 %v479
        %709 = vmatpush2.msra.mxu0 %v478
        %710 = vmatprep.mubr.f32.mxu0 %v564
        %711 = vmatmul.mubr.f32.gmra.mxu0 %v376
        %v712 = vpop.f32.mrf.mxu0
        %v713 = vadd.f32 %v543, %v712
        %v714 = vpop.f32.mrf.mxu0
        %v715 = vadd.f32 %v547, %v714
        %716 = vmatprep.mubr.f32.mxu0 %v567
        %717 = vmatmul.mubr.f32.gmra.mxu0 %v378
        %v718 = vpop.f32.mrf.mxu0
        %v719 = vadd.f32 %v543, %v718
        %v720 = vpop.f32.mrf.mxu0
        %v721 = vadd.f32 %v547, %v720
        %722 = vdwg.mxu0
        %723 = vmatprep.subr.mxu0 %v475
        %724 = vmatpush1.msra.mxu0 %v474
        %725 = vmatprep.subr.mxu0 %v469
        %726 = vmatpush1.msra.mxu0 %v468
        %727 = vmatprep.subr.mxu0 %v463
        %728 = vmatpush1.msra.mxu0 %v462
        %729 = vmatprep.subr.mxu0 %v457
        %730 = vmatpush1.msra.mxu0 %v456
        %731 = vmatprep.subr.mxu0 %v451
        %732 = vmatpush1.msra.mxu0 %v450
        %733 = vmatprep.subr.mxu0 %v445
        %734 = vmatpush1.msra.mxu0 %v444
        %735 = vmatprep.subr.mxu0 %v439
        %736 = vmatpush1.msra.mxu0 %v438
        %737 = vmatprep.subr.mxu0 %v433
        %738 = vmatpush1.msra.mxu0 %v432
        %739 = vmatprep.subr.mxu0 %v427
        %740 = vmatpush1.msra.mxu0 %v426
        %741 = vmatprep.subr.mxu0 %v421
        %742 = vmatpush1.msra.mxu0 %v420
        %743 = vmatprep.subr.mxu0 %v415
        %744 = vmatpush1.msra.mxu0 %v414
        %745 = vmatprep.subr.mxu0 %v409
        %746 = vmatpush1.msra.mxu0 %v408
        %747 = vmatprep.subr.mxu0 %v403
        %748 = vmatpush1.msra.mxu0 %v402
        %749 = vmatprep.subr.mxu0 %v397
        %750 = vmatpush1.msra.mxu0 %v396
        %751 = vmatprep.subr.mxu0 %v391
        %752 = vmatpush1.msra.mxu0 %v390
        %753 = vmatprep.subr.mxu0 %v385
        %754 = vmatpush1.msra.mxu0 %v384
        %755 = vmatprep.subr.mxu0 0.0
        %756 = vmatpush2.msra.mxu0 0.0
        %757 = vmatprep.subr.mxu0 0.0
        %758 = vmatpush2.msra.mxu0 0.0
        %759 = vmatprep.subr.mxu0 0.0
        %760 = vmatpush2.msra.mxu0 0.0
        %761 = vmatprep.subr.mxu0 0.0
        %762 = vmatpush2.msra.mxu0 0.0
        %763 = vmatprep.subr.mxu0 0.0
        %764 = vmatpush2.msra.mxu0 0.0
        %765 = vmatprep.subr.mxu0 0.0
        %766 = vmatpush2.msra.mxu0 0.0
        %767 = vmatprep.subr.mxu0 0.0
        %768 = vmatpush2.msra.mxu0 0.0
        %769 = vmatprep.subr.mxu0 %v529
        %770 = vmatpush2.msra.mxu0 %v528
        %771 = vmatprep.subr.mxu0 %v523
        %772 = vmatpush2.msra.mxu0 %v522
        %773 = vmatprep.subr.mxu0 %v517
        %774 = vmatpush2.msra.mxu0 %v516
        %775 = vmatprep.subr.mxu0 %v511
        %776 = vmatpush2.msra.mxu0 %v510
        %777 = vmatprep.subr.mxu0 %v505
        %778 = vmatpush2.msra.mxu0 %v504
        %779 = vmatprep.subr.mxu0 %v499
        %780 = vmatpush2.msra.mxu0 %v498
        %781 = vmatprep.subr.mxu0 %v493
        %782 = vmatpush2.msra.mxu0 %v492
        %783 = vmatprep.subr.mxu0 %v487
        %784 = vmatpush2.msra.mxu0 %v486
        %785 = vmatprep.subr.mxu0 %v481
        %786 = vmatpush2.msra.mxu0 %v480
        %787 = vmatprep.mubr.f32.mxu0 %v564
        %788 = vmatmul.mubr.f32.gmra.mxu0 %v376
        %v789 = vpop.f32.mrf.mxu0
        %v790 = vadd.f32 %v551, %v789
        %v791 = vpop.f32.mrf.mxu0
        %v792 = vadd.f32 %v555, %v791
        %793 = vmatprep.mubr.f32.mxu0 %v567
        %794 = vmatmul.mubr.f32.gmra.mxu0 %v378
        %v795 = vpop.f32.mrf.mxu0
        %v796 = vadd.f32 %v551, %v795
        %v797 = vpop.f32.mrf.mxu0
        %v798 = vadd.f32 %v555, %v797
        %799 = vdwg.mxu0
        %800 = vst [vmem:[%s243] sm:$0xff] %v636
        %801 = vst [vmem:[%s243 + $0x8] sm:$0xff] %v638
        %802 = vst [vmem:[%s243 + $0x10] sm:$0xff] %v713
        %803 = vst [vmem:[%s243 + $0x18] sm:$0xff] %v715
        %804 = vst [vmem:[%s243 + $0x20] sm:$0xff] %v790
        %805 = vst [vmem:[%s243 + $0x28] sm:$0xff] %v792
        %806 = vst [vmem:[%s243 + $0x30] sm:$0xff] %v642
        %807 = vst [vmem:[%s243 + $0x38] sm:$0xff] %v644
        %808 = vst [vmem:[%s243 + $0x40] sm:$0xff] %v719
        %809 = vst [vmem:[%s243 + $0x48] sm:$0xff] %v721
        %810 = vst [vmem:[%s243 + $0x50] sm:$0xff] %v796
        %811 = vst [vmem:[%s243 + $0x58] sm:$0xff] %v798
        %s812 = smul.u32 2, %s17
        %p813 = scmp.lt.s32.totalorder %s812, 5
        %s814 = scalar_select %p813, %s812, 5
        %s815 = smul.addr %s814, 6
        %s816 = smul.addr %s815, 8
        %s817 = scalar_lea.vmem %s5, %s816
        // Predicated region
        $region45: #{reviews_decoder.1} parent=39 // pred_check
          %p818 = pneg %p145
        $region46: #{reviews_decoder.1} parent=39 // pred_check_branch
          %820 = sbr.rel (%p818) target = $region48
        $region47: #{reviews_decoder.1} parent=39 // pred_region
          %s821 = smul.u32 2, %s17
        $region48: #{reviews_decoder.1} parent=39 // pred_fallthru
          _
      $region40: #{reviews_decoder.1} parent=5 // pred_fallthru
        _
      %p822 = scmp.le.s32.totalorder 2, %s12
      // Predicated region
      $region49: #{reviews_decoder.1} parent=5 // pred_check
        %p823 = pneg %p822
      $region50: #{reviews_decoder.1} parent=5 // pred_check_branch
        %825 = sbr.rel (%p823) target = $region52
      $region51: #{reviews_decoder.1} parent=5 // pred_region
        %s826 = ssub.s32 %s12, 2
        // Predicated region
        $region53: #{reviews_decoder.1} parent=51 // pred_check
          %p827 = pneg %p151
        $region54: #{reviews_decoder.1} parent=51 // pred_check_branch
          %829 = sbr.rel (%p827) target = $region56
        $region55: #{reviews_decoder.1} parent=51 // pred_region
          %s830 = smul.u32 2, %s18
          %p831 = scmp.lt.s32.totalorder %s830, 5
          %s832 = scalar_select %p831, %s830, 5
          %s833 = smul.addr %s832, 6
          %s834 = smul.addr %s833, 8
          %s835 = scalar_lea.vmem %s5, %s834
        $region56: #{reviews_decoder.1} parent=51 // pred_fallthru
          _
      $region52: #{reviews_decoder.1} parent=5 // pred_fallthru
        _
    $region6: #{reviews_decoder.1} parent=1 // loop_footer
      %s16 = sadd.s32 1, %s12
    $region7: #{reviews_decoder.1} parent=1 // loop_footer_branch
      %11 = sbr.rel target = $region3
    $region8: #{reviews_decoder.1} parent=1 // loop_exit
      _
    %836 = vsyncpa [#allocation3], 1
    %s837 = scalar_lea.sflag [#allocation3], 1
    %838 = vsyncpa %s837, 1

</llo_original>
